<compile_context>
chip_gen: v5e
topology: v5e:2x2
jax: 0.10.0
libtpu: 0.0.40
codegen_flags: <defaults>
</compile_context>

<pallas_src>
import jax
import jax.numpy as jnp
from jax.experimental import pallas as pl
from jax.experimental.pallas import tpu as pltpu


def _round_up(x, m):
    return ((x + m - 1) // m) * m


def _round_down8(x):
    return max(8, (x // 8) * 8)


def _ae_kernel(
    x_ref,
    we1_ref, be1_ref,
    we2_ref, be2_ref,
    we3_ref, be3_ref,
    wz_ref, bz_ref,
    wd1_ref, bd1_ref,
    wd2_ref, bd2_ref,
    wd3_ref, bd3_ref,
    wxb_ref, bxb_ref,
    xbar_ref, h1_ref, h2_ref, h3_ref, z_ref,
):
    x = x_ref[...]

    def linear(a, w_ref, b_ref):
        a = a.astype(w_ref.dtype)  # no-op in f32 mode; bf16 cast if enabled
        y = jnp.dot(a, w_ref[...], preferred_element_type=jnp.float32)
        return y + b_ref[...].astype(jnp.float32)

    # Encoder — store each activation eagerly (frees vregs, early output DMA).
    h1 = jnp.maximum(linear(x, we1_ref, be1_ref), 0.0)
    h1_ref[...] = h1.astype(h1_ref.dtype)

    h2 = jnp.maximum(linear(h1, we2_ref, be2_ref), 0.0)
    h2_ref[...] = h2.astype(h2_ref.dtype)

    h3 = jnp.maximum(linear(h2, we3_ref, be3_ref), 0.0)
    h3_ref[...] = h3.astype(h3_ref.dtype)

    z = linear(h3, wz_ref, bz_ref)
    z_ref[...] = z.astype(z_ref.dtype)

    # Decoder
    d1 = jnp.maximum(linear(z, wd1_ref, bd1_ref), 0.0)
    d2 = jnp.maximum(linear(d1, wd2_ref, bd2_ref), 0.0)
    d3 = jnp.maximum(linear(d2, wd3_ref, bd3_ref), 0.0)
    xbar_ref[...] = linear(d3, wxb_ref, bxb_ref).astype(xbar_ref.dtype)


_LAYER_ORDER = [
    "enc_1", "enc_2", "enc_3", "z_layer",
    "dec_1", "dec_2", "dec_3", "x_bar_layer",
]


def ae_forward(x, params, *, batch_tile=1024, use_bf16=False):
    """AE forward pass.

    x: (B, n_input) float32.
    params: dict name -> (weight (in, out), bias (1, out)).
    Returns (x_bar, enc_h1, enc_h2, enc_h3, z), matching the PyTorch module.
    """
    B, n_input = x.shape
    widths = [params[name][0].shape[1] for name in _LAYER_ORDER]
    n_enc_1, n_enc_2, n_enc_3, n_z = widths[0], widths[1], widths[2], widths[3]
    n_dec_1, n_dec_2, n_dec_3 = widths[4], widths[5], widths[6]

    # Flatten params (unpadded); optional bf16 cast for weights/biases.
    wdtype = jnp.bfloat16 if use_bf16 else jnp.float32
    flat_params = []
    for name in _LAYER_ORDER:
        w, b = params[name]
        flat_params.append(w.astype(wdtype))
        flat_params.append(b.astype(wdtype))
    param_bytes = sum(int(p.size) * p.dtype.itemsize for p in flat_params)

    # Outputs at logical widths (lane-padding is not written to HBM).
    out_widths = [n_input, n_enc_1, n_enc_2, n_enc_3, n_z]

    # ---- batch tile selection -------------------------------------------
    tile = batch_tile
    if B >= 64:
        # Guarantee >= 2 grid steps so v7x megacore can shard the batch.
        tile = min(tile, _round_down8(B // 2))
    tile = min(tile, B)
    if tile < B:
        tile = _round_down8(tile)

    # VMEM budget: physical capacity minus headroom, capped conservatively.
    try:
        phys_vmem = int(pltpu.get_tpu_info().vmem_capacity_bytes)
    except Exception:
        phys_vmem = 64 << 20  # assume the smallest (v7x) budget
    vmem_cap = min(phys_vmem - (8 << 20), 100 << 20)

    def footprint(t):
        io = 2 * t * 4 * (n_input + sum(out_widths))        # double-buffered I/O
        scratch = t * 4 * (n_dec_1 + n_dec_2 + n_dec_3)      # decoder intermediates
        return io + scratch + 2 * param_bytes + (8 << 20)    # params + headroom

    while tile > 8 and footprint(tile) > vmem_cap:
        tile = _round_down8(tile // 2)

    vmem_limit = int(max(32 << 20, min(footprint(tile), vmem_cap)))

    Bp = _round_up(B, tile)
    x_in = x if Bp == B else jnp.pad(x, ((0, Bp - B), (0, 0)))
    grid = (Bp // tile,)

    # ---- specs ------------------------------------------------------------
    in_specs = [pl.BlockSpec((tile, n_input), lambda i: (i, 0))]
    for p in flat_params:
        in_specs.append(pl.BlockSpec(p.shape, lambda i: (0, 0)))

    out_shapes = tuple(jax.ShapeDtypeStruct((Bp, w), jnp.float32) for w in out_widths)
    out_specs = tuple(pl.BlockSpec((tile, w), lambda i: (i, 0)) for w in out_widths)

    fn = pl.pallas_call(
        _ae_kernel,
        out_shape=out_shapes,
        grid_spec=pltpu.PrefetchScalarGridSpec(
            num_scalar_prefetch=0,
            grid=grid,
            in_specs=in_specs,
            out_specs=out_specs,
        ),
        compiler_params=pltpu.CompilerParams(
            dimension_semantics=("parallel",),
            vmem_limit_bytes=vmem_limit,
        ),
    )
    xbar_p, h1_p, h2_p, h3_p, z_p = fn(x_in, *flat_params)

    if Bp == B:
        return xbar_p, h1_p, h2_p, h3_p, z_p
    return xbar_p[:B], h1_p[:B], h2_p[:B], h3_p[:B], z_p[:B]


def init_ae_params(key, n_enc_1, n_enc_2, n_enc_3, n_dec_1, n_dec_2, n_dec_3,
                   n_input, n_z):
    """uniform(-1/sqrt(fan_in), 1/sqrt(fan_in)), mirroring torch.nn.Linear.
    Weights stored as (in, out) so the kernel computes y = x @ W + b."""
    dims = {
        "enc_1": (n_input, n_enc_1),
        "enc_2": (n_enc_1, n_enc_2),
        "enc_3": (n_enc_2, n_enc_3),
        "z_layer": (n_enc_3, n_z),
        "dec_1": (n_z, n_dec_1),
        "dec_2": (n_dec_1, n_dec_2),
        "dec_3": (n_dec_2, n_dec_3),
        "x_bar_layer": (n_dec_3, n_input),
    }
    params = {}
    for name, (fan_in, fan_out) in dims.items():
        key, wk, bk = jax.random.split(key, 3)
        bound = 1.0 / jnp.sqrt(jnp.float32(fan_in))
        w = jax.random.uniform(wk, (fan_in, fan_out), jnp.float32, -bound, bound)
        b = jax.random.uniform(bk, (1, fan_out), jnp.float32, -bound, bound)
        params[name] = (w, b)
    return params


def ae_forward_ref(x, params):
    """Pure-JAX reference of the PyTorch forward."""
    def lin(a, name):
        w, b = params[name]
        return a @ w + b

    h1 = jax.nn.relu(lin(x, "enc_1"))
    h2 = jax.nn.relu(lin(h1, "enc_2"))
    h3 = jax.nn.relu(lin(h2, "enc_3"))
    z = lin(h3, "z_layer")
    d1 = jax.nn.relu(lin(z, "dec_1"))
    d2 = jax.nn.relu(lin(d1, "dec_2"))
    d3 = jax.nn.relu(lin(d2, "dec_3"))
    x_bar = lin(d3, "x_bar_layer")
    return x_bar, h1, h2, h3, z


def _check(x, params, **kw):
    outs = jax.block_until_ready(ae_forward(x, params, **kw))
    refs = ae_forward_ref(x, params)
    for o, r in zip(outs, refs):
        assert o.shape == r.shape and o.dtype == r.dtype
        assert jnp.allclose(o, r, atol=1e-4, rtol=1e-4)


if __name__ == "__main__":
    # Small, module-consistent sizes.
    n_input, n_z = 32, 16
    n_enc_1, n_enc_2, n_enc_3 = 64, 64, 128
    n_dec_1, n_dec_2, n_dec_3 = 128, 64, 64

    key = jax.random.PRNGKey(0)
    params = init_ae_params(
        key, n_enc_1, n_enc_2, n_enc_3, n_dec_1, n_dec_2, n_dec_3, n_input, n_z
    )

    # Tiny batch -> single-step grid.
    key, xk = jax.random.split(key)
    x_small = jax.random.normal(xk, (16, n_input), jnp.float32)
    _check(x_small, params)

    # Mid-size batch -> >= 2 "parallel" grid steps (v7x megacore-friendly).
    key, xk = jax.random.split(key)
    x_big = jax.random.normal(xk, (512, n_input), jnp.float32)
    _check(x_big, params)

    # Ragged batch -> exercises batch padding / slicing path.
    key, xk = jax.random.split(key)
    x_rag = jax.random.normal(xk, (200, n_input), jnp.float32)
    _check(x_rag, params)

    print("KERNEL_OK")
</pallas_src>

<mosaic_0001>
module attributes {stable_mosaic.version = 11 : i64} {
  func.func @_ae_kernel(%arg0: i32, %arg1: memref<16x32xf32, #tpu.memory_space<vmem>>, %arg2: memref<32x64xf32, #tpu.memory_space<vmem>>, %arg3: memref<1x64xf32, #tpu.memory_space<vmem>>, %arg4: memref<64x64xf32, #tpu.memory_space<vmem>>, %arg5: memref<1x64xf32, #tpu.memory_space<vmem>>, %arg6: memref<64x128xf32, #tpu.memory_space<vmem>>, %arg7: memref<1x128xf32, #tpu.memory_space<vmem>>, %arg8: memref<128x16xf32, #tpu.memory_space<vmem>>, %arg9: memref<1x16xf32, #tpu.memory_space<vmem>>, %arg10: memref<16x128xf32, #tpu.memory_space<vmem>>, %arg11: memref<1x128xf32, #tpu.memory_space<vmem>>, %arg12: memref<128x64xf32, #tpu.memory_space<vmem>>, %arg13: memref<1x64xf32, #tpu.memory_space<vmem>>, %arg14: memref<64x64xf32, #tpu.memory_space<vmem>>, %arg15: memref<1x64xf32, #tpu.memory_space<vmem>>, %arg16: memref<64x32xf32, #tpu.memory_space<vmem>>, %arg17: memref<1x32xf32, #tpu.memory_space<vmem>>, %arg18: memref<16x32xf32, #tpu.memory_space<vmem>>, %arg19: memref<16x64xf32, #tpu.memory_space<vmem>>, %arg20: memref<16x64xf32, #tpu.memory_space<vmem>>, %arg21: memref<16x128xf32, #tpu.memory_space<vmem>>, %arg22: memref<16x16xf32, #tpu.memory_space<vmem>>) attributes {dimension_semantics = [#tpu.dimension_semantics<parallel>], iteration_bounds = array<i64: 1>, scalar_prefetch = 0 : i64, scratch_operands = 0 : i64, tpu.core_type = #tpu.core_type<tc>, window_params = [{transform_indices = @transform_0, window_bounds = array<i64: 16, 32>}, {pipeline_mode = #tpu.pipeline_mode<synchronous>, transform_indices = @transform_1, window_bounds = array<i64: 32, 64>}, {pipeline_mode = #tpu.pipeline_mode<synchronous>, transform_indices = @transform_2, window_bounds = array<i64: 1, 64>}, {pipeline_mode = #tpu.pipeline_mode<synchronous>, transform_indices = @transform_3, window_bounds = array<i64: 64, 64>}, {pipeline_mode = #tpu.pipeline_mode<synchronous>, transform_indices = @transform_4, window_bounds = array<i64: 1, 64>}, {pipeline_mode = #tpu.pipeline_mode<synchronous>, transform_indices = @transform_5, window_bounds = array<i64: 64, 128>}, {pipeline_mode = #tpu.pipeline_mode<synchronous>, transform_indices = @transform_6, window_bounds = array<i64: 1, 128>}, {pipeline_mode = #tpu.pipeline_mode<synchronous>, transform_indices = @transform_7, window_bounds = array<i64: 128, 16>}, {pipeline_mode = #tpu.pipeline_mode<synchronous>, transform_indices = @transform_8, window_bounds = array<i64: 1, 16>}, {pipeline_mode = #tpu.pipeline_mode<synchronous>, transform_indices = @transform_9, window_bounds = array<i64: 16, 128>}, {pipeline_mode = #tpu.pipeline_mode<synchronous>, transform_indices = @transform_10, window_bounds = array<i64: 1, 128>}, {pipeline_mode = #tpu.pipeline_mode<synchronous>, transform_indices = @transform_11, window_bounds = array<i64: 128, 64>}, {pipeline_mode = #tpu.pipeline_mode<synchronous>, transform_indices = @transform_12, window_bounds = array<i64: 1, 64>}, {pipeline_mode = #tpu.pipeline_mode<synchronous>, transform_indices = @transform_13, window_bounds = array<i64: 64, 64>}, {pipeline_mode = #tpu.pipeline_mode<synchronous>, transform_indices = @transform_14, window_bounds = array<i64: 1, 64>}, {pipeline_mode = #tpu.pipeline_mode<synchronous>, transform_indices = @transform_15, window_bounds = array<i64: 64, 32>}, {pipeline_mode = #tpu.pipeline_mode<synchronous>, transform_indices = @transform_16, window_bounds = array<i64: 1, 32>}, {transform_indices = @transform_17, window_bounds = array<i64: 16, 32>}, {transform_indices = @transform_18, window_bounds = array<i64: 16, 64>}, {transform_indices = @transform_19, window_bounds = array<i64: 16, 64>}, {transform_indices = @transform_20, window_bounds = array<i64: 16, 128>}, {transform_indices = @transform_21, window_bounds = array<i64: 16, 16>}]} {
    %c0 = arith.constant 0 : index
    %c0_0 = arith.constant 0 : index
    %0 = vector.load %arg1[%c0, %c0_0] : memref<16x32xf32, #tpu.memory_space<vmem>>, vector<16x32xf32>
    %c0_1 = arith.constant 0 : index
    %c0_2 = arith.constant 0 : index
    %1 = vector.load %arg2[%c0_1, %c0_2] : memref<32x64xf32, #tpu.memory_space<vmem>>, vector<32x64xf32>
    %cst = arith.constant dense<0.000000e+00> : vector<16x64xf32>
    %2 = tpu.matmul %0, %1, %cst {dimension_numbers = #tpu.dot_dimension_numbers<[1], [0], [0], [1], [0, 0, 1, 1], [], []>} : vector<16x32xf32>, vector<32x64xf32>, vector<16x64xf32> -> vector<16x64xf32>
    %c0_3 = arith.constant 0 : index
    %c0_4 = arith.constant 0 : index
    %3 = vector.load %arg3[%c0_3, %c0_4] : memref<1x64xf32, #tpu.memory_space<vmem>>, vector<1x64xf32>
    %4 = vector.broadcast %3 : vector<1x64xf32> to vector<16x64xf32>
    %5 = arith.addf %2, %4 : vector<16x64xf32>
    %cst_5 = arith.constant 0.000000e+00 : f32
    %6 = vector.broadcast %cst_5 : f32 to vector<16x64xf32>
    %7 = arith.maximumf %5, %6 : vector<16x64xf32>
    %c0_6 = arith.constant 0 : index
    %c0_7 = arith.constant 0 : index
    %8 = vector.load %arg19[%c0_6, %c0_7] : memref<16x64xf32, #tpu.memory_space<vmem>>, vector<16x64xf32>
    tpu.vector_store %arg19[%c0_6, %c0_7], %7 {strides = array<i32>} : memref<16x64xf32, #tpu.memory_space<vmem>>, vector<16x64xf32>,
    %c0_8 = arith.constant 0 : index
    %c0_9 = arith.constant 0 : index
    %9 = vector.load %arg4[%c0_8, %c0_9] : memref<64x64xf32, #tpu.memory_space<vmem>>, vector<64x64xf32>
    %cst_10 = arith.constant dense<0.000000e+00> : vector<16x64xf32>
    %10 = tpu.matmul %7, %9, %cst_10 {dimension_numbers = #tpu.dot_dimension_numbers<[1], [0], [0], [1], [0, 0, 1, 1], [], []>} : vector<16x64xf32>, vector<64x64xf32>, vector<16x64xf32> -> vector<16x64xf32>
    %c0_11 = arith.constant 0 : index
    %c0_12 = arith.constant 0 : index
    %11 = vector.load %arg5[%c0_11, %c0_12] : memref<1x64xf32, #tpu.memory_space<vmem>>, vector<1x64xf32>
    %12 = vector.broadcast %11 : vector<1x64xf32> to vector<16x64xf32>
    %13 = arith.addf %10, %12 : vector<16x64xf32>
    %cst_13 = arith.constant 0.000000e+00 : f32
    %14 = vector.broadcast %cst_13 : f32 to vector<16x64xf32>
    %15 = arith.maximumf %13, %14 : vector<16x64xf32>
    %c0_14 = arith.constant 0 : index
    %c0_15 = arith.constant 0 : index
    %16 = vector.load %arg20[%c0_14, %c0_15] : memref<16x64xf32, #tpu.memory_space<vmem>>, vector<16x64xf32>
    tpu.vector_store %arg20[%c0_14, %c0_15], %15 {strides = array<i32>} : memref<16x64xf32, #tpu.memory_space<vmem>>, vector<16x64xf32>,
    %c0_16 = arith.constant 0 : index
    %c0_17 = arith.constant 0 : index
    %17 = vector.load %arg6[%c0_16, %c0_17] : memref<64x128xf32, #tpu.memory_space<vmem>>, vector<64x128xf32>
    %cst_18 = arith.constant dense<0.000000e+00> : vector<16x128xf32>
    %18 = tpu.matmul %15, %17, %cst_18 {dimension_numbers = #tpu.dot_dimension_numbers<[1], [0], [0], [1], [0, 0, 1, 1], [], []>} : vector<16x64xf32>, vector<64x128xf32>, vector<16x128xf32> -> vector<16x128xf32>
    %c0_19 = arith.constant 0 : index
    %c0_20 = arith.constant 0 : index
    %19 = vector.load %arg7[%c0_19, %c0_20] : memref<1x128xf32, #tpu.memory_space<vmem>>, vector<1x128xf32>
    %20 = vector.broadcast %19 : vector<1x128xf32> to vector<16x128xf32>
    %21 = arith.addf %18, %20 : vector<16x128xf32>
    %cst_21 = arith.constant 0.000000e+00 : f32
    %22 = vector.broadcast %cst_21 : f32 to vector<16x128xf32>
    %23 = arith.maximumf %21, %22 : vector<16x128xf32>
    %c0_22 = arith.constant 0 : index
    %c0_23 = arith.constant 0 : index
    %24 = vector.load %arg21[%c0_22, %c0_23] : memref<16x128xf32, #tpu.memory_space<vmem>>, vector<16x128xf32>
    tpu.vector_store %arg21[%c0_22, %c0_23], %23 {strides = array<i32>} : memref<16x128xf32, #tpu.memory_space<vmem>>, vector<16x128xf32>,
    %c0_24 = arith.constant 0 : index
    %c0_25 = arith.constant 0 : index
    %25 = vector.load %arg8[%c0_24, %c0_25] : memref<128x16xf32, #tpu.memory_space<vmem>>, vector<128x16xf32>
    %cst_26 = arith.constant dense<0.000000e+00> : vector<16x16xf32>
    %26 = tpu.matmul %23, %25, %cst_26 {dimension_numbers = #tpu.dot_dimension_numbers<[1], [0], [0], [1], [0, 0, 1, 1], [], []>} : vector<16x128xf32>, vector<128x16xf32>, vector<16x16xf32> -> vector<16x16xf32>
    %c0_27 = arith.constant 0 : index
    %c0_28 = arith.constant 0 : index
    %27 = vector.load %arg9[%c0_27, %c0_28] : memref<1x16xf32, #tpu.memory_space<vmem>>, vector<1x16xf32>
    %28 = vector.broadcast %27 : vector<1x16xf32> to vector<16x16xf32>
    %29 = arith.addf %26, %28 : vector<16x16xf32>
    %c0_29 = arith.constant 0 : index
    %c0_30 = arith.constant 0 : index
    %30 = vector.load %arg22[%c0_29, %c0_30] : memref<16x16xf32, #tpu.memory_space<vmem>>, vector<16x16xf32>
    tpu.vector_store %arg22[%c0_29, %c0_30], %29 {strides = array<i32>} : memref<16x16xf32, #tpu.memory_space<vmem>>, vector<16x16xf32>,
    %c0_31 = arith.constant 0 : index
    %c0_32 = arith.constant 0 : index
    %31 = vector.load %arg10[%c0_31, %c0_32] : memref<16x128xf32, #tpu.memory_space<vmem>>, vector<16x128xf32>
    %cst_33 = arith.constant dense<0.000000e+00> : vector<16x128xf32>
    %32 = tpu.matmul %29, %31, %cst_33 {dimension_numbers = #tpu.dot_dimension_numbers<[1], [0], [0], [1], [0, 0, 1, 1], [], []>} : vector<16x16xf32>, vector<16x128xf32>, vector<16x128xf32> -> vector<16x128xf32>
    %c0_34 = arith.constant 0 : index
    %c0_35 = arith.constant 0 : index
    %33 = vector.load %arg11[%c0_34, %c0_35] : memref<1x128xf32, #tpu.memory_space<vmem>>, vector<1x128xf32>
    %34 = vector.broadcast %33 : vector<1x128xf32> to vector<16x128xf32>
    %35 = arith.addf %32, %34 : vector<16x128xf32>
    %cst_36 = arith.constant 0.000000e+00 : f32
    %36 = vector.broadcast %cst_36 : f32 to vector<16x128xf32>
    %37 = arith.maximumf %35, %36 : vector<16x128xf32>
    %c0_37 = arith.constant 0 : index
    %c0_38 = arith.constant 0 : index
    %38 = vector.load %arg12[%c0_37, %c0_38] : memref<128x64xf32, #tpu.memory_space<vmem>>, vector<128x64xf32>
    %cst_39 = arith.constant dense<0.000000e+00> : vector<16x64xf32>
    %39 = tpu.matmul %37, %38, %cst_39 {dimension_numbers = #tpu.dot_dimension_numbers<[1], [0], [0], [1], [0, 0, 1, 1], [], []>} : vector<16x128xf32>, vector<128x64xf32>, vector<16x64xf32> -> vector<16x64xf32>
    %c0_40 = arith.constant 0 : index
    %c0_41 = arith.constant 0 : index
    %40 = vector.load %arg13[%c0_40, %c0_41] : memref<1x64xf32, #tpu.memory_space<vmem>>, vector<1x64xf32>
    %41 = vector.broadcast %40 : vector<1x64xf32> to vector<16x64xf32>
    %42 = arith.addf %39, %41 : vector<16x64xf32>
    %cst_42 = arith.constant 0.000000e+00 : f32
    %43 = vector.broadcast %cst_42 : f32 to vector<16x64xf32>
    %44 = arith.maximumf %42, %43 : vector<16x64xf32>
    %c0_43 = arith.constant 0 : index
    %c0_44 = arith.constant 0 : index
    %45 = vector.load %arg14[%c0_43, %c0_44] : memref<64x64xf32, #tpu.memory_space<vmem>>, vector<64x64xf32>
    %cst_45 = arith.constant dense<0.000000e+00> : vector<16x64xf32>
    %46 = tpu.matmul %44, %45, %cst_45 {dimension_numbers = #tpu.dot_dimension_numbers<[1], [0], [0], [1], [0, 0, 1, 1], [], []>} : vector<16x64xf32>, vector<64x64xf32>, vector<16x64xf32> -> vector<16x64xf32>
    %c0_46 = arith.constant 0 : index
    %c0_47 = arith.constant 0 : index
    %47 = vector.load %arg15[%c0_46, %c0_47] : memref<1x64xf32, #tpu.memory_space<vmem>>, vector<1x64xf32>
    %48 = vector.broadcast %47 : vector<1x64xf32> to vector<16x64xf32>
    %49 = arith.addf %46, %48 : vector<16x64xf32>
    %cst_48 = arith.constant 0.000000e+00 : f32
    %50 = vector.broadcast %cst_48 : f32 to vector<16x64xf32>
    %51 = arith.maximumf %49, %50 : vector<16x64xf32>
    %c0_49 = arith.constant 0 : index
    %c0_50 = arith.constant 0 : index
    %52 = vector.load %arg16[%c0_49, %c0_50] : memref<64x32xf32, #tpu.memory_space<vmem>>, vector<64x32xf32>
    %cst_51 = arith.constant dense<0.000000e+00> : vector<16x32xf32>
    %53 = tpu.matmul %51, %52, %cst_51 {dimension_numbers = #tpu.dot_dimension_numbers<[1], [0], [0], [1], [0, 0, 1, 1], [], []>} : vector<16x64xf32>, vector<64x32xf32>, vector<16x32xf32> -> vector<16x32xf32>
    %c0_52 = arith.constant 0 : index
    %c0_53 = arith.constant 0 : index
    %54 = vector.load %arg17[%c0_52, %c0_53] : memref<1x32xf32, #tpu.memory_space<vmem>>, vector<1x32xf32>
    %55 = vector.broadcast %54 : vector<1x32xf32> to vector<16x32xf32>
    %56 = arith.addf %53, %55 : vector<16x32xf32>
    %c0_54 = arith.constant 0 : index
    %c0_55 = arith.constant 0 : index
    %57 = vector.load %arg18[%c0_54, %c0_55] : memref<16x32xf32, #tpu.memory_space<vmem>>, vector<16x32xf32>
    tpu.vector_store %arg18[%c0_54, %c0_55], %56 {strides = array<i32>} : memref<16x32xf32, #tpu.memory_space<vmem>>, vector<16x32xf32>,
    return
  }
  func.func @transform_0(%arg0: i32) -> (i32, i32) {
    %c0_i32 = arith.constant 0 : i32
    %c0_i32_0 = arith.constant 0 : i32
    return %arg0, %c0_i32 : i32, i32
  }
  func.func @transform_1(%arg0: i32) -> (i32, i32) {
    %c0_i32 = arith.constant 0 : i32
    %c0_i32_0 = arith.constant 0 : i32
    %c0_i32_1 = arith.constant 0 : i32
    return %c0_i32, %c0_i32_0 : i32, i32
  }
  func.func @transform_2(%arg0: i32) -> (i32, i32) {
    %c0_i32 = arith.constant 0 : i32
    %c0_i32_0 = arith.constant 0 : i32
    %c0_i32_1 = arith.constant 0 : i32
    return %c0_i32, %c0_i32_0 : i32, i32
  }
  func.func @transform_3(%arg0: i32) -> (i32, i32) {
    %c0_i32 = arith.constant 0 : i32
    %c0_i32_0 = arith.constant 0 : i32
    %c0_i32_1 = arith.constant 0 : i32
    return %c0_i32, %c0_i32_0 : i32, i32
  }
  func.func @transform_4(%arg0: i32) -> (i32, i32) {
    %c0_i32 = arith.constant 0 : i32
    %c0_i32_0 = arith.constant 0 : i32
    %c0_i32_1 = arith.constant 0 : i32
    return %c0_i32, %c0_i32_0 : i32, i32
  }
  func.func @transform_5(%arg0: i32) -> (i32, i32) {
    %c0_i32 = arith.constant 0 : i32
    %c0_i32_0 = arith.constant 0 : i32
    %c0_i32_1 = arith.constant 0 : i32
    return %c0_i32, %c0_i32_0 : i32, i32
  }
  func.func @transform_6(%arg0: i32) -> (i32, i32) {
    %c0_i32 = arith.constant 0 : i32
    %c0_i32_0 = arith.constant 0 : i32
    %c0_i32_1 = arith.constant 0 : i32
    return %c0_i32, %c0_i32_0 : i32, i32
  }
  func.func @transform_7(%arg0: i32) -> (i32, i32) {
    %c0_i32 = arith.constant 0 : i32
    %c0_i32_0 = arith.constant 0 : i32
    %c0_i32_1 = arith.constant 0 : i32
    return %c0_i32, %c0_i32_0 : i32, i32
  }
  func.func @transform_8(%arg0: i32) -> (i32, i32) {
    %c0_i32 = arith.constant 0 : i32
    %c0_i32_0 = arith.constant 0 : i32
    %c0_i32_1 = arith.constant 0 : i32
    return %c0_i32, %c0_i32_0 : i32, i32
  }
  func.func @transform_9(%arg0: i32) -> (i32, i32) {
    %c0_i32 = arith.constant 0 : i32
    %c0_i32_0 = arith.constant 0 : i32
    %c0_i32_1 = arith.constant 0 : i32
    return %c0_i32, %c0_i32_0 : i32, i32
  }
  func.func @transform_10(%arg0: i32) -> (i32, i32) {
    %c0_i32 = arith.constant 0 : i32
    %c0_i32_0 = arith.constant 0 : i32
    %c0_i32_1 = arith.constant 0 : i32
    return %c0_i32, %c0_i32_0 : i32, i32
  }
  func.func @transform_11(%arg0: i32) -> (i32, i32) {
    %c0_i32 = arith.constant 0 : i32
    %c0_i32_0 = arith.constant 0 : i32
    %c0_i32_1 = arith.constant 0 : i32
    return %c0_i32, %c0_i32_0 : i32, i32
  }
  func.func @transform_12(%arg0: i32) -> (i32, i32) {
    %c0_i32 = arith.constant 0 : i32
    %c0_i32_0 = arith.constant 0 : i32
    %c0_i32_1 = arith.constant 0 : i32
    return %c0_i32, %c0_i32_0 : i32, i32
  }
  func.func @transform_13(%arg0: i32) -> (i32, i32) {
    %c0_i32 = arith.constant 0 : i32
    %c0_i32_0 = arith.constant 0 : i32
    %c0_i32_1 = arith.constant 0 : i32
    return %c0_i32, %c0_i32_0 : i32, i32
  }
  func.func @transform_14(%arg0: i32) -> (i32, i32) {
    %c0_i32 = arith.constant 0 : i32
    %c0_i32_0 = arith.constant 0 : i32
    %c0_i32_1 = arith.constant 0 : i32
    return %c0_i32, %c0_i32_0 : i32, i32
  }
  func.func @transform_15(%arg0: i32) -> (i32, i32) {
    %c0_i32 = arith.constant 0 : i32
    %c0_i32_0 = arith.constant 0 : i32
    %c0_i32_1 = arith.constant 0 : i32
    return %c0_i32, %c0_i32_0 : i32, i32
  }
  func.func @transform_16(%arg0: i32) -> (i32, i32) {
    %c0_i32 = arith.constant 0 : i32
    %c0_i32_0 = arith.constant 0 : i32
    %c0_i32_1 = arith.constant 0 : i32
    return %c0_i32, %c0_i32_0 : i32, i32
  }
  func.func @transform_17(%arg0: i32) -> (i32, i32) {
    %c0_i32 = arith.constant 0 : i32
    %c0_i32_0 = arith.constant 0 : i32
    return %arg0, %c0_i32 : i32, i32
  }
  func.func @transform_18(%arg0: i32) -> (i32, i32) {
    %c0_i32 = arith.constant 0 : i32
    %c0_i32_0 = arith.constant 0 : i32
    return %arg0, %c0_i32 : i32, i32
  }
  func.func @transform_19(%arg0: i32) -> (i32, i32) {
    %c0_i32 = arith.constant 0 : i32
    %c0_i32_0 = arith.constant 0 : i32
    return %arg0, %c0_i32 : i32, i32
  }
  func.func @transform_20(%arg0: i32) -> (i32, i32) {
    %c0_i32 = arith.constant 0 : i32
    %c0_i32_0 = arith.constant 0 : i32
    return %arg0, %c0_i32 : i32, i32
  }
  func.func @transform_21(%arg0: i32) -> (i32, i32) {
    %c0_i32 = arith.constant 0 : i32
    %c0_i32_0 = arith.constant 0 : i32
    return %arg0, %c0_i32 : i32, i32
  }
}

</mosaic_0001>

<llo_original>
// kernel: tpu_custom_call.1
$region0: #{tpu_custom_call.1}
  #allocation0 [shape = 'u32[]', space=smem, size = 0x4, offset = 0x4, fixed_abs, tag = 'smem constant byte address 0x4 - core index']
  #allocation1 [shape = 'u32[72,128]{1,0:T(1,128)}', space=vmem, size = 0x9000, scoped, tag = 'internal scratch']
  %s0 = inlined_call_operand.vmem [shape: f32[16,32], index: 0, kind: input, shape index: {}]
  %s1 = inlined_call_operand.vmem [shape: f32[32,64], index: 1, kind: input, shape index: {}]
  %s2 = inlined_call_operand.vmem [shape: f32[1,64], index: 2, kind: input, shape index: {}]
  %s3 = inlined_call_operand.vmem [shape: f32[64,64], index: 3, kind: input, shape index: {}]
  %s4 = inlined_call_operand.vmem [shape: f32[1,64], index: 4, kind: input, shape index: {}]
  %s5 = inlined_call_operand.vmem [shape: f32[64,128], index: 5, kind: input, shape index: {}]
  %s6 = inlined_call_operand.vmem [shape: f32[1,128], index: 6, kind: input, shape index: {}]
  %s7 = inlined_call_operand.vmem [shape: f32[128,16], index: 7, kind: input, shape index: {}]
  %s8 = inlined_call_operand.vmem [shape: f32[1,16], index: 8, kind: input, shape index: {}]
  %s9 = inlined_call_operand.vmem [shape: f32[16,128], index: 9, kind: input, shape index: {}]
  %s10 = inlined_call_operand.vmem [shape: f32[1,128], index: 10, kind: input, shape index: {}]
  %s11 = inlined_call_operand.vmem [shape: f32[128,64], index: 11, kind: input, shape index: {}]
  %s12 = inlined_call_operand.vmem [shape: f32[1,64], index: 12, kind: input, shape index: {}]
  %s13 = inlined_call_operand.vmem [shape: f32[64,64], index: 13, kind: input, shape index: {}]
  %s14 = inlined_call_operand.vmem [shape: f32[1,64], index: 14, kind: input, shape index: {}]
  %s15 = inlined_call_operand.vmem [shape: f32[64,32], index: 15, kind: input, shape index: {}]
  %s16 = inlined_call_operand.vmem [shape: f32[1,32], index: 16, kind: input, shape index: {}]
  %s17 = inlined_call_operand.hbm [shape: f32[16,32], index: 17, kind: output, shape index: {0}]
  %s18 = inlined_call_operand.hbm [shape: f32[16,64], index: 18, kind: output, shape index: {1}]
  %s19 = inlined_call_operand.hbm [shape: f32[16,64], index: 19, kind: output, shape index: {2}]
  %s20 = inlined_call_operand.hbm [shape: f32[16,128], index: 20, kind: output, shape index: {3}]
  %s21 = inlined_call_operand.hbm [shape: f32[16,16], index: 21, kind: output, shape index: {4}]
  %22 = xla_tuple %s17, %s18, %s19, %s20, %s21
  %s23 = sld [smem:[#allocation0]]
  $region110: #{tpu_custom_call.1} parent=0
    _
  %s25 = ssub.s32 1, %s23
  %s26 = scalar_select 0, %s25, %s23
  $region1: #{tpu_custom_call.1} parent=0
    #allocation2 [shape = 'u8[8192]{0}', space=vmem, size = 0x2000, scoped, tag = 'output window, operand 0, single buffered']
    #allocation3 [shape = 's32[1]{0}', space=sflag, size = 0x4, scoped, tag = 'scoped memory for tpu_custom_call.1']
    #allocation4 [shape = 'u8[8192]{0}', space=vmem, size = 0x2000, scoped, tag = 'output window, operand 1, single buffered']
    #allocation5 [shape = 's32[1]{0}', space=sflag, size = 0x4, scoped, tag = 'scoped memory for tpu_custom_call.1']
    #allocation6 [shape = 'u8[8192]{0}', space=vmem, size = 0x2000, scoped, tag = 'output window, operand 2, single buffered']
    #allocation7 [shape = 'u8[8192]{0}', space=vmem, size = 0x2000, scoped, tag = 'output window, operand 3, single buffered']
    #allocation8 [shape = 's32[1]{0}', space=sflag, size = 0x4, scoped, tag = 'scoped memory for tpu_custom_call.1']
    #allocation9 [shape = 'u8[8192]{0}', space=vmem, size = 0x2000, scoped, tag = 'output window, operand 4, single buffered']
    %27 = vsyncpa [#allocation3], 0
    %28 = vsyncpa [#allocation5], 0
    %29 = vsyncpa [#allocation8], 0
    // Predicated region
    $region2: #{tpu_custom_call.1} parent=1 // pred_check
      _
    $region3: #{tpu_custom_call.1} parent=1 // pred_check_branch
      %31 = sbr.rel (0) target = $region5
    $region4: #{tpu_custom_call.1} parent=1 // pred_region
      _
    $region5: #{tpu_custom_call.1} parent=1 // pred_fallthru
      _
    // Predicated region
    $region6: #{tpu_custom_call.1} parent=1 // pred_check
      _
    $region7: #{tpu_custom_call.1} parent=1 // pred_check_branch
      %33 = sbr.rel (0) target = $region9
    $region8: #{tpu_custom_call.1} parent=1 // pred_region
      _
    $region9: #{tpu_custom_call.1} parent=1 // pred_fallthru
      _
    // Predicated region
    $region10: #{tpu_custom_call.1} parent=1 // pred_check
      _
    $region11: #{tpu_custom_call.1} parent=1 // pred_check_branch
      %35 = sbr.rel (0) target = $region13
    $region12: #{tpu_custom_call.1} parent=1 // pred_region
      _
    $region13: #{tpu_custom_call.1} parent=1 // pred_fallthru
      _
    // Predicated region
    $region14: #{tpu_custom_call.1} parent=1 // pred_check
      _
    $region15: #{tpu_custom_call.1} parent=1 // pred_check_branch
      %37 = sbr.rel (0) target = $region17
    $region16: #{tpu_custom_call.1} parent=1 // pred_region
      _
    $region17: #{tpu_custom_call.1} parent=1 // pred_fallthru
      _
    // Predicated region
    $region18: #{tpu_custom_call.1} parent=1 // pred_check
      _
    $region19: #{tpu_custom_call.1} parent=1 // pred_check_branch
      %39 = sbr.rel (0) target = $region21
    $region20: #{tpu_custom_call.1} parent=1 // pred_region
      _
    $region21: #{tpu_custom_call.1} parent=1 // pred_fallthru
      _
    // Predicated region
    $region22: #{tpu_custom_call.1} parent=1 // pred_check
      _
    $region23: #{tpu_custom_call.1} parent=1 // pred_check_branch
      %41 = sbr.rel (0) target = $region25
    $region24: #{tpu_custom_call.1} parent=1 // pred_region
      _
    $region25: #{tpu_custom_call.1} parent=1 // pred_fallthru
      _
    // Predicated region
    $region26: #{tpu_custom_call.1} parent=1 // pred_check
      _
    $region27: #{tpu_custom_call.1} parent=1 // pred_check_branch
      %43 = sbr.rel (0) target = $region29
    $region28: #{tpu_custom_call.1} parent=1 // pred_region
      _
    $region29: #{tpu_custom_call.1} parent=1 // pred_fallthru
      _
    // Predicated region
    $region30: #{tpu_custom_call.1} parent=1 // pred_check
      _
    $region31: #{tpu_custom_call.1} parent=1 // pred_check_branch
      %45 = sbr.rel (0) target = $region33
    $region32: #{tpu_custom_call.1} parent=1 // pred_region
      _
    $region33: #{tpu_custom_call.1} parent=1 // pred_fallthru
      _
    // Predicated region
    $region34: #{tpu_custom_call.1} parent=1 // pred_check
      _
    $region35: #{tpu_custom_call.1} parent=1 // pred_check_branch
      %47 = sbr.rel (0) target = $region37
    $region36: #{tpu_custom_call.1} parent=1 // pred_region
      _
    $region37: #{tpu_custom_call.1} parent=1 // pred_fallthru
      _
    // Predicated region
    $region38: #{tpu_custom_call.1} parent=1 // pred_check
      _
    $region39: #{tpu_custom_call.1} parent=1 // pred_check_branch
      %49 = sbr.rel (0) target = $region41
    $region40: #{tpu_custom_call.1} parent=1 // pred_region
      _
    $region41: #{tpu_custom_call.1} parent=1 // pred_fallthru
      _
    // Predicated region
    $region42: #{tpu_custom_call.1} parent=1 // pred_check
      _
    $region43: #{tpu_custom_call.1} parent=1 // pred_check_branch
      %51 = sbr.rel (0) target = $region45
    $region44: #{tpu_custom_call.1} parent=1 // pred_region
      _
    $region45: #{tpu_custom_call.1} parent=1 // pred_fallthru
      _
    // Predicated region
    $region46: #{tpu_custom_call.1} parent=1 // pred_check
      _
    $region47: #{tpu_custom_call.1} parent=1 // pred_check_branch
      %53 = sbr.rel (0) target = $region49
    $region48: #{tpu_custom_call.1} parent=1 // pred_region
      _
    $region49: #{tpu_custom_call.1} parent=1 // pred_fallthru
      _
    // Predicated region
    $region50: #{tpu_custom_call.1} parent=1 // pred_check
      _
    $region51: #{tpu_custom_call.1} parent=1 // pred_check_branch
      %55 = sbr.rel (0) target = $region53
    $region52: #{tpu_custom_call.1} parent=1 // pred_region
      _
    $region53: #{tpu_custom_call.1} parent=1 // pred_fallthru
      _
    // Predicated region
    $region54: #{tpu_custom_call.1} parent=1 // pred_check
      _
    $region55: #{tpu_custom_call.1} parent=1 // pred_check_branch
      %57 = sbr.rel (0) target = $region57
    $region56: #{tpu_custom_call.1} parent=1 // pred_region
      _
    $region57: #{tpu_custom_call.1} parent=1 // pred_fallthru
      _
    // Predicated region
    $region58: #{tpu_custom_call.1} parent=1 // pred_check
      _
    $region59: #{tpu_custom_call.1} parent=1 // pred_check_branch
      %59 = sbr.rel (0) target = $region61
    $region60: #{tpu_custom_call.1} parent=1 // pred_region
      _
    $region61: #{tpu_custom_call.1} parent=1 // pred_fallthru
      _
    // Predicated region
    $region62: #{tpu_custom_call.1} parent=1 // pred_check
      _
    $region63: #{tpu_custom_call.1} parent=1 // pred_check_branch
      %61 = sbr.rel (0) target = $region65
    $region64: #{tpu_custom_call.1} parent=1 // pred_region
      _
    $region65: #{tpu_custom_call.1} parent=1 // pred_fallthru
      _
    // Predicated region
    $region66: #{tpu_custom_call.1} parent=1 // pred_check
      _
    $region67: #{tpu_custom_call.1} parent=1 // pred_check_branch
      %63 = sbr.rel (0) target = $region69
    $region68: #{tpu_custom_call.1} parent=1 // pred_region
      _
    $region69: #{tpu_custom_call.1} parent=1 // pred_fallthru
      _
    %v64 = vld [vmem:[%s0] sm:$0xff]
    %v65 = vld [vmem:[%s0 + $0x8] sm:$0xff]
    %v66 = vld [vmem:[%s1] sm:$0xff]
    %v67 = vld [vmem:[%s1 + $0x8] sm:$0xff]
    %v68 = vld [vmem:[%s1 + $0x10] sm:$0xff]
    %v69 = vld [vmem:[%s1 + $0x18] sm:$0xff]
    %v70 = vld [vmem:[%s2] sm:$0x1]
    %v72 = vperm.slane %v70, 0
    %vm74 = vcmask 261120
    %v76 = vsel %vm74, %v64, 0
    %v79 = vsel %vm74, %v65, 0
    %81 = vmatpush.msra.mxu0 0.0
    %82 = vmatpush.msra.mxu0 0.0
    %83 = vmatpush.msra.mxu0 0.0
    %84 = vmatpush.msra.mxu0 0.0
    %85 = vmatpush.msra.mxu0 0.0
    %86 = vmatpush.msra.mxu0 0.0
    %87 = vmatpush.msra.mxu0 0.0
    %88 = vmatpush.msra.mxu0 0.0
    %89 = vmatpush.msra.mxu0 0.0
    %90 = vmatpush.msra.mxu0 0.0
    %91 = vmatpush.msra.mxu0 0.0
    %92 = vmatpush.msra.mxu0 0.0
    %93 = vmatpush.msra.mxu0 %v69
    %94 = vmatpush.msra.mxu0 %v68
    %95 = vmatpush.msra.mxu0 %v67
    %96 = vmatpush.msra.mxu0 %v66
    %97 = vmatmul.f32.gmra.mxu0 %v76
    %v98 = vpop.f32.mrf.mxu0
    %v99 = vadd.f32 %v72, %v98
    %100 = vmatmul.f32.gmra.mxu0 %v79
    %v101 = vpop.f32.mrf.mxu0
    %v102 = vadd.f32 %v72, %v101
    %103 = vdwg.mxu0
    %v104 = vmax.f32 %v99, 0.0
    %v105 = vmax.f32 %v102, 0.0
    %vm106 = vcmask 523264
    %107 = vst.msk [vmem:[#allocation4] sm:$0xff] %vm106, %v104
    %108 = vst.msk [vmem:[#allocation4 + $0x8] sm:$0xff] %vm106, %v105
    %v109 = vld [vmem:[%s3] sm:$0xff]
    %v110 = vld [vmem:[%s3 + $0x8] sm:$0xff]
    %v111 = vld [vmem:[%s3 + $0x10] sm:$0xff]
    %v112 = vld [vmem:[%s3 + $0x18] sm:$0xff]
    %v113 = vld [vmem:[%s3 + $0x20] sm:$0xff]
    %v114 = vld [vmem:[%s3 + $0x28] sm:$0xff]
    %v115 = vld [vmem:[%s3 + $0x30] sm:$0xff]
    %v116 = vld [vmem:[%s3 + $0x38] sm:$0xff]
    %v117 = vld [vmem:[%s4] sm:$0x1]
    %v119 = vperm.slane %v117, 0
    %v122 = vsel %vm106, %v104, 0
    %v125 = vsel %vm106, %v105, 0
    %127 = vmatpush.msra.mxu0 0.0
    %128 = vmatpush.msra.mxu0 0.0
    %129 = vmatpush.msra.mxu0 0.0
    %130 = vmatpush.msra.mxu0 0.0
    %131 = vmatpush.msra.mxu0 0.0
    %132 = vmatpush.msra.mxu0 0.0
    %133 = vmatpush.msra.mxu0 0.0
    %134 = vmatpush.msra.mxu0 0.0
    %135 = vmatpush.msra.mxu0 %v116
    %136 = vmatpush.msra.mxu0 %v115
    %137 = vmatpush.msra.mxu0 %v114
    %138 = vmatpush.msra.mxu0 %v113
    %139 = vmatpush.msra.mxu0 %v112
    %140 = vmatpush.msra.mxu0 %v111
    %141 = vmatpush.msra.mxu0 %v110
    %142 = vmatpush.msra.mxu0 %v109
    %143 = vmatmul.f32.gmra.mxu0 %v122
    %v144 = vpop.f32.mrf.mxu0
    %v145 = vadd.f32 %v119, %v144
    %146 = vmatmul.f32.gmra.mxu0 %v125
    %v147 = vpop.f32.mrf.mxu0
    %v148 = vadd.f32 %v119, %v147
    %149 = vdwg.mxu0
    %v150 = vmax.f32 %v145, 0.0
    %v151 = vmax.f32 %v148, 0.0
    %152 = vst.msk [vmem:[#allocation6] sm:$0xff] %vm106, %v150
    %153 = vst.msk [vmem:[#allocation6 + $0x8] sm:$0xff] %vm106, %v151
    %v154 = vld [vmem:[%s5] sm:$0xff]
    %v155 = vld [vmem:[%s5 + $0x8] sm:$0xff]
    %v156 = vld [vmem:[%s5 + $0x10] sm:$0xff]
    %v157 = vld [vmem:[%s5 + $0x18] sm:$0xff]
    %v158 = vld [vmem:[%s5 + $0x20] sm:$0xff]
    %v159 = vld [vmem:[%s5 + $0x28] sm:$0xff]
    %v160 = vld [vmem:[%s5 + $0x30] sm:$0xff]
    %v161 = vld [vmem:[%s5 + $0x38] sm:$0xff]
    %v162 = vld [vmem:[%s6] sm:$0x1]
    %v164 = vperm.slane %v162, 0
    %v167 = vsel %vm106, %v150, 0
    %v170 = vsel %vm106, %v151, 0
    %172 = vmatpush.msra.mxu0 0.0
    %173 = vmatpush.msra.mxu0 0.0
    %174 = vmatpush.msra.mxu0 0.0
    %175 = vmatpush.msra.mxu0 0.0
    %176 = vmatpush.msra.mxu0 0.0
    %177 = vmatpush.msra.mxu0 0.0
    %178 = vmatpush.msra.mxu0 0.0
    %179 = vmatpush.msra.mxu0 0.0
    %180 = vmatpush.msra.mxu0 %v161
    %181 = vmatpush.msra.mxu0 %v160
    %182 = vmatpush.msra.mxu0 %v159
    %183 = vmatpush.msra.mxu0 %v158
    %184 = vmatpush.msra.mxu0 %v157
    %185 = vmatpush.msra.mxu0 %v156
    %186 = vmatpush.msra.mxu0 %v155
    %187 = vmatpush.msra.mxu0 %v154
    %188 = vmatmul.f32.gmra.mxu0 %v167
    %v189 = vpop.f32.mrf.mxu0
    %v190 = vadd.f32 %v164, %v189
    %191 = vmatmul.f32.gmra.mxu0 %v170
    %v192 = vpop.f32.mrf.mxu0
    %v193 = vadd.f32 %v164, %v192
    %194 = vdwg.mxu0
    %v195 = vmax.f32 %v190, 0.0
    %v196 = vmax.f32 %v193, 0.0
    %197 = vst [vmem:[#allocation7] sm:$0xff] %v195
    %198 = vst [vmem:[#allocation7 + $0x8] sm:$0xff] %v196
    %v199 = vld [vmem:[%s7] sm:$0xff]
    %v200 = vld [vmem:[%s7 + $0x8] sm:$0xff]
    %v201 = vld [vmem:[%s7 + $0x10] sm:$0xff]
    %v202 = vld [vmem:[%s7 + $0x18] sm:$0xff]
    %v203 = vld [vmem:[%s7 + $0x20] sm:$0xff]
    %v204 = vld [vmem:[%s7 + $0x28] sm:$0xff]
    %v205 = vld [vmem:[%s7 + $0x30] sm:$0xff]
    %v206 = vld [vmem:[%s7 + $0x38] sm:$0xff]
    %v207 = vld [vmem:[%s7 + $0x40] sm:$0xff]
    %v208 = vld [vmem:[%s7 + $0x48] sm:$0xff]
    %v209 = vld [vmem:[%s7 + $0x50] sm:$0xff]
    %v210 = vld [vmem:[%s7 + $0x58] sm:$0xff]
    %v211 = vld [vmem:[%s7 + $0x60] sm:$0xff]
    %v212 = vld [vmem:[%s7 + $0x68] sm:$0xff]
    %v213 = vld [vmem:[%s7 + $0x70] sm:$0xff]
    %v214 = vld [vmem:[%s7 + $0x78] sm:$0xff]
    %v215 = vld [vmem:[%s8] sm:$0x1]
    %v217 = vperm.slane %v215, 0
    %219 = vmatpush.msra.mxu0 %v214
    %220 = vmatpush.msra.mxu0 %v213
    %221 = vmatpush.msra.mxu0 %v212
    %222 = vmatpush.msra.mxu0 %v211
    %223 = vmatpush.msra.mxu0 %v210
    %224 = vmatpush.msra.mxu0 %v209
    %225 = vmatpush.msra.mxu0 %v208
    %226 = vmatpush.msra.mxu0 %v207
    %227 = vmatpush.msra.mxu0 %v206
    %228 = vmatpush.msra.mxu0 %v205
    %229 = vmatpush.msra.mxu0 %v204
    %230 = vmatpush.msra.mxu0 %v203
    %231 = vmatpush.msra.mxu0 %v202
    %232 = vmatpush.msra.mxu0 %v201
    %233 = vmatpush.msra.mxu0 %v200
    %234 = vmatpush.msra.mxu0 %v199
    %235 = vmatmul.f32.gmra.mxu0 %v195
    %v236 = vpop.f32.mrf.mxu0
    %v237 = vadd.f32 %v217, %v236
    %238 = vmatmul.f32.gmra.mxu0 %v196
    %v239 = vpop.f32.mrf.mxu0
    %v240 = vadd.f32 %v217, %v239
    %241 = vdwg.mxu0
    %vm242 = vcmask 130048
    %243 = vst.msk [vmem:[#allocation9] sm:$0xff] %vm242, %v237
    %244 = vst.msk [vmem:[#allocation9 + $0x8] sm:$0xff] %vm242, %v240
    %v245 = vld [vmem:[%s9] sm:$0xff]
    %v246 = vld [vmem:[%s9 + $0x8] sm:$0xff]
    %v247 = vld [vmem:[%s10] sm:$0x1]
    %v249 = vperm.slane %v247, 0
    %v252 = vsel %vm242, %v237, 0
    %v255 = vsel %vm242, %v240, 0
    %257 = vmatpush.msra.mxu0 0.0
    %258 = vmatpush.msra.mxu0 0.0
    %259 = vmatpush.msra.mxu0 0.0
    %260 = vmatpush.msra.mxu0 0.0
    %261 = vmatpush.msra.mxu0 0.0
    %262 = vmatpush.msra.mxu0 0.0
    %263 = vmatpush.msra.mxu0 0.0
    %264 = vmatpush.msra.mxu0 0.0
    %265 = vmatpush.msra.mxu0 0.0
    %266 = vmatpush.msra.mxu0 0.0
    %267 = vmatpush.msra.mxu0 0.0
    %268 = vmatpush.msra.mxu0 0.0
    %269 = vmatpush.msra.mxu0 0.0
    %270 = vmatpush.msra.mxu0 0.0
    %271 = vmatpush.msra.mxu0 %v246
    %272 = vmatpush.msra.mxu0 %v245
    %273 = vmatmul.f32.gmra.mxu0 %v252
    %v274 = vpop.f32.mrf.mxu0
    %v275 = vadd.f32 %v249, %v274
    %276 = vmatmul.f32.gmra.mxu0 %v255
    %v277 = vpop.f32.mrf.mxu0
    %v278 = vadd.f32 %v249, %v277
    %279 = vdwg.mxu0
    %v280 = vmax.f32 %v275, 0.0
    %v281 = vmax.f32 %v278, 0.0
    %v282 = vld [vmem:[%s11] sm:$0xff]
    %v283 = vld [vmem:[%s11 + $0x8] sm:$0xff]
    %v284 = vld [vmem:[%s11 + $0x10] sm:$0xff]
    %v285 = vld [vmem:[%s11 + $0x18] sm:$0xff]
    %v286 = vld [vmem:[%s11 + $0x20] sm:$0xff]
    %v287 = vld [vmem:[%s11 + $0x28] sm:$0xff]
    %v288 = vld [vmem:[%s11 + $0x30] sm:$0xff]
    %v289 = vld [vmem:[%s11 + $0x38] sm:$0xff]
    %v290 = vld [vmem:[%s11 + $0x40] sm:$0xff]
    %v291 = vld [vmem:[%s11 + $0x48] sm:$0xff]
    %v292 = vld [vmem:[%s11 + $0x50] sm:$0xff]
    %v293 = vld [vmem:[%s11 + $0x58] sm:$0xff]
    %v294 = vld [vmem:[%s11 + $0x60] sm:$0xff]
    %v295 = vld [vmem:[%s11 + $0x68] sm:$0xff]
    %v296 = vld [vmem:[%s11 + $0x70] sm:$0xff]
    %v297 = vld [vmem:[%s11 + $0x78] sm:$0xff]
    %v298 = vld [vmem:[%s12] sm:$0x1]
    %v300 = vperm.slane %v298, 0
    %302 = vmatpush.msra.mxu0 %v297
    %303 = vmatpush.msra.mxu0 %v296
    %304 = vmatpush.msra.mxu0 %v295
    %305 = vmatpush.msra.mxu0 %v294
    %306 = vmatpush.msra.mxu0 %v293
    %307 = vmatpush.msra.mxu0 %v292
    %308 = vmatpush.msra.mxu0 %v291
    %309 = vmatpush.msra.mxu0 %v290
    %310 = vmatpush.msra.mxu0 %v289
    %311 = vmatpush.msra.mxu0 %v288
    %312 = vmatpush.msra.mxu0 %v287
    %313 = vmatpush.msra.mxu0 %v286
    %314 = vmatpush.msra.mxu0 %v285
    %315 = vmatpush.msra.mxu0 %v284
    %316 = vmatpush.msra.mxu0 %v283
    %317 = vmatpush.msra.mxu0 %v282
    %318 = vmatmul.f32.gmra.mxu0 %v280
    %v319 = vpop.f32.mrf.mxu0
    %v320 = vadd.f32 %v300, %v319
    %321 = vmatmul.f32.gmra.mxu0 %v281
    %v322 = vpop.f32.mrf.mxu0
    %v323 = vadd.f32 %v300, %v322
    %324 = vdwg.mxu0
    %v325 = vmax.f32 %v320, 0.0
    %v326 = vmax.f32 %v323, 0.0
    %v327 = vld [vmem:[%s13] sm:$0xff]
    %v328 = vld [vmem:[%s13 + $0x8] sm:$0xff]
    %v329 = vld [vmem:[%s13 + $0x10] sm:$0xff]
    %v330 = vld [vmem:[%s13 + $0x18] sm:$0xff]
    %v331 = vld [vmem:[%s13 + $0x20] sm:$0xff]
    %v332 = vld [vmem:[%s13 + $0x28] sm:$0xff]
    %v333 = vld [vmem:[%s13 + $0x30] sm:$0xff]
    %v334 = vld [vmem:[%s13 + $0x38] sm:$0xff]
    %v335 = vld [vmem:[%s14] sm:$0x1]
    %v337 = vperm.slane %v335, 0
    %v340 = vsel %vm106, %v325, 0
    %v343 = vsel %vm106, %v326, 0
    %345 = vmatpush.msra.mxu0 0.0
    %346 = vmatpush.msra.mxu0 0.0
    %347 = vmatpush.msra.mxu0 0.0
    %348 = vmatpush.msra.mxu0 0.0
    %349 = vmatpush.msra.mxu0 0.0
    %350 = vmatpush.msra.mxu0 0.0
    %351 = vmatpush.msra.mxu0 0.0
    %352 = vmatpush.msra.mxu0 0.0
    %353 = vmatpush.msra.mxu0 %v334
    %354 = vmatpush.msra.mxu0 %v333
    %355 = vmatpush.msra.mxu0 %v332
    %356 = vmatpush.msra.mxu0 %v331
    %357 = vmatpush.msra.mxu0 %v330
    %358 = vmatpush.msra.mxu0 %v329
    %359 = vmatpush.msra.mxu0 %v328
    %360 = vmatpush.msra.mxu0 %v327
    %361 = vmatmul.f32.gmra.mxu0 %v340
    %v362 = vpop.f32.mrf.mxu0
    %v363 = vadd.f32 %v337, %v362
    %364 = vmatmul.f32.gmra.mxu0 %v343
    %v365 = vpop.f32.mrf.mxu0
    %v366 = vadd.f32 %v337, %v365
    %367 = vdwg.mxu0
    %v368 = vmax.f32 %v363, 0.0
    %v369 = vmax.f32 %v366, 0.0
    %v370 = vld [vmem:[%s15] sm:$0xff]
    %v371 = vld [vmem:[%s15 + $0x8] sm:$0xff]
    %v372 = vld [vmem:[%s15 + $0x10] sm:$0xff]
    %v373 = vld [vmem:[%s15 + $0x18] sm:$0xff]
    %v374 = vld [vmem:[%s15 + $0x20] sm:$0xff]
    %v375 = vld [vmem:[%s15 + $0x28] sm:$0xff]
    %v376 = vld [vmem:[%s15 + $0x30] sm:$0xff]
    %v377 = vld [vmem:[%s15 + $0x38] sm:$0xff]
    %v378 = vld [vmem:[%s16] sm:$0x1]
    %v380 = vperm.slane %v378, 0
    %v383 = vsel %vm106, %v368, 0
    %v386 = vsel %vm106, %v369, 0
    %388 = vmatpush.msra.mxu0 0.0
    %389 = vmatpush.msra.mxu0 0.0
    %390 = vmatpush.msra.mxu0 0.0
    %391 = vmatpush.msra.mxu0 0.0
    %392 = vmatpush.msra.mxu0 0.0
    %393 = vmatpush.msra.mxu0 0.0
    %394 = vmatpush.msra.mxu0 0.0
    %395 = vmatpush.msra.mxu0 0.0
    %396 = vmatpush.msra.mxu0 %v377
    %397 = vmatpush.msra.mxu0 %v376
    %398 = vmatpush.msra.mxu0 %v375
    %399 = vmatpush.msra.mxu0 %v374
    %400 = vmatpush.msra.mxu0 %v373
    %401 = vmatpush.msra.mxu0 %v372
    %402 = vmatpush.msra.mxu0 %v371
    %403 = vmatpush.msra.mxu0 %v370
    %404 = vmatmul.f32.gmra.mxu0 %v383
    %v405 = vpop.f32.mrf.mxu0
    %v406 = vadd.f32 %v380, %v405
    %407 = vmatmul.f32.gmra.mxu0 %v386
    %v408 = vpop.f32.mrf.mxu0
    %v409 = vadd.f32 %v380, %v408
    %410 = vdwg.mxu0
    %411 = vst.msk [vmem:[#allocation2] sm:$0xff] %vm74, %v406
    %412 = vst.msk [vmem:[#allocation2 + $0x8] sm:$0xff] %vm74, %v409
    // Predicated region
    $region70: #{tpu_custom_call.1} parent=1 // pred_check
      _
    $region71: #{tpu_custom_call.1} parent=1 // pred_check_branch
      %414 = sbr.rel (0) target = $region73
    $region72: #{tpu_custom_call.1} parent=1 // pred_region
      %416 = vsyncadd [#allocation3], 0
      %s417 = sshll.u32 [#allocation2], 4
      %s418 = int_to_ptr.vmem [resolvable:$true] %s417
      %s419 = sshll.u32 %s17, 4
      %s420 = int_to_ptr.hbm [resolvable:$true] %s419
      %425 = dma.vmem_to_hbm [thread:$0]  %s418, 256, %s420, [#allocation3], 128, 128, 8
    $region73: #{tpu_custom_call.1} parent=1 // pred_fallthru
      _
    // Predicated region
    $region74: #{tpu_custom_call.1} parent=1 // pred_check
      _
    $region75: #{tpu_custom_call.1} parent=1 // pred_check_branch
      %427 = sbr.rel (0) target = $region77
    $region76: #{tpu_custom_call.1} parent=1 // pred_region
      %429 = vsyncadd [#allocation5], 0
      %s430 = sshll.u32 [#allocation4], 4
      %s431 = int_to_ptr.vmem [resolvable:$true] %s430
      %s432 = sshll.u32 %s18, 4
      %s433 = int_to_ptr.hbm [resolvable:$true] %s432
      %438 = dma.vmem_to_hbm [thread:$0]  %s431, 256, %s433, [#allocation5], 128, 128, 8
    $region77: #{tpu_custom_call.1} parent=1 // pred_fallthru
      _
    // Predicated region
    $region78: #{tpu_custom_call.1} parent=1 // pred_check
      _
    $region79: #{tpu_custom_call.1} parent=1 // pred_check_branch
      %440 = sbr.rel (0) target = $region81
    $region80: #{tpu_custom_call.1} parent=1 // pred_region
      %442 = vsyncadd [#allocation5], 0
      %s443 = sshll.u32 [#allocation6], 4
      %s444 = int_to_ptr.vmem [resolvable:$true] %s443
      %s445 = sshll.u32 %s19, 4
      %s446 = int_to_ptr.hbm [resolvable:$true] %s445
      %451 = dma.vmem_to_hbm [thread:$0]  %s444, 256, %s446, [#allocation5], 128, 128, 8
    $region81: #{tpu_custom_call.1} parent=1 // pred_fallthru
      _
    // Predicated region
    $region82: #{tpu_custom_call.1} parent=1 // pred_check
      _
    $region83: #{tpu_custom_call.1} parent=1 // pred_check_branch
      %453 = sbr.rel (0) target = $region85
    $region84: #{tpu_custom_call.1} parent=1 // pred_region
      %455 = vsyncadd [#allocation8], 0
      %s456 = sshll.u32 [#allocation7], 4
      %s457 = int_to_ptr.vmem [resolvable:$true] %s456
      %s458 = sshll.u32 %s20, 4
      %s459 = int_to_ptr.hbm [resolvable:$true] %s458
      %464 = dma.vmem_to_hbm [thread:$0]  %s457, 256, %s459, [#allocation8], 128, 128, 8
    $region85: #{tpu_custom_call.1} parent=1 // pred_fallthru
      _
    // Predicated region
    $region86: #{tpu_custom_call.1} parent=1 // pred_check
      _
    $region87: #{tpu_custom_call.1} parent=1 // pred_check_branch
      %466 = sbr.rel (0) target = $region89
    $region88: #{tpu_custom_call.1} parent=1 // pred_region
      %468 = vsyncadd [#allocation8], 0
      %s469 = sshll.u32 [#allocation9], 4
      %s470 = int_to_ptr.vmem [resolvable:$true] %s469
      %s471 = sshll.u32 %s21, 4
      %s472 = int_to_ptr.hbm [resolvable:$true] %s471
      %477 = dma.vmem_to_hbm [thread:$0]  %s470, 256, %s472, [#allocation8], 128, 128, 8
    $region89: #{tpu_custom_call.1} parent=1 // pred_fallthru
      _
    // Predicated region
    $region90: #{tpu_custom_call.1} parent=1 // pred_check
      _
    $region91: #{tpu_custom_call.1} parent=1 // pred_check_branch
      %479 = sbr.rel (0) target = $region93
    $region92: #{tpu_custom_call.1} parent=1 // pred_region
      %481 = dma.done [#allocation3], 256
    $region93: #{tpu_custom_call.1} parent=1 // pred_fallthru
      _
    // Predicated region
    $region94: #{tpu_custom_call.1} parent=1 // pred_check
      _
    $region95: #{tpu_custom_call.1} parent=1 // pred_check_branch
      %483 = sbr.rel (0) target = $region97
    $region96: #{tpu_custom_call.1} parent=1 // pred_region
      %485 = dma.done [#allocation5], 256
    $region97: #{tpu_custom_call.1} parent=1 // pred_fallthru
      _
    // Predicated region
    $region98: #{tpu_custom_call.1} parent=1 // pred_check
      _
    $region99: #{tpu_custom_call.1} parent=1 // pred_check_branch
      %487 = sbr.rel (0) target = $region101
    $region100: #{tpu_custom_call.1} parent=1 // pred_region
      %489 = dma.done [#allocation5], 256
    $region101: #{tpu_custom_call.1} parent=1 // pred_fallthru
      _
    // Predicated region
    $region102: #{tpu_custom_call.1} parent=1 // pred_check
      _
    $region103: #{tpu_custom_call.1} parent=1 // pred_check_branch
      %491 = sbr.rel (0) target = $region105
    $region104: #{tpu_custom_call.1} parent=1 // pred_region
      %493 = dma.done [#allocation8], 256
    $region105: #{tpu_custom_call.1} parent=1 // pred_fallthru
      _
    // Predicated region
    $region106: #{tpu_custom_call.1} parent=1 // pred_check
      _
    $region107: #{tpu_custom_call.1} parent=1 // pred_check_branch
      %495 = sbr.rel (0) target = $region109
    $region108: #{tpu_custom_call.1} parent=1 // pred_region
      %497 = dma.done [#allocation8], 256
    $region109: #{tpu_custom_call.1} parent=1 // pred_fallthru
      _
    %498 = vsyncpa [#allocation3], 1
    %499 = vsyncpa [#allocation5], 1
    %500 = vsyncpa [#allocation8], 1

</llo_original>
